<compile_context>
chip_gen: v6e
topology: v6e:2x2x1
jax: 0.10.0
libtpu: 0.0.40
codegen_flags: <defaults>
</compile_context>

<pallas_src>
import jax
import jax.numpy as jnp
from jax.experimental import pallas as pl
from jax.experimental.pallas import tpu as pltpu

# Sizes implied by the module (STATE_SIZE / ACTION_SIZE come from the izombie env;
# small deterministic values for this synthetic kernel).
STATE_SIZE = 64
ACTION_SIZE = 16
N_HIDDEN_LAYER_NODES = 100
LEAKY_SLOPE = 0.01  # nn.LeakyReLU() default negative_slope

# Lane-aligned (padded) dims used inside the kernel.
H_PAD = 128  # hidden 100 -> 128
A_PAD = 128  # actions 16 -> 128 (lane-dense output store)


def dqn_mlp_kernel(x_ref, w1_ref, b1_ref, w2_ref, b2_ref, o_ref):
    # Hidden layer: (TB, S)bf16 @ (S, H_PAD)bf16 -> f32 accumulate on the MXU.
    h = jnp.dot(x_ref[...], w1_ref[...], preferred_element_type=jnp.float32)
    h = h + b1_ref[...]                       # f32 bias (VPU)
    h = jnp.maximum(h, LEAKY_SLOPE * h)       # LeakyReLU: mul + max
    # Output layer: cast activations to bf16 for the MXU, accumulate in f32.
    out = jnp.dot(h.astype(jnp.bfloat16), w2_ref[...],
                  preferred_element_type=jnp.float32)
    out = out + b2_ref[...]
    o_ref[...] = out.astype(o_ref.dtype)      # unmasked 128-lane store


def dqn_forward(x, params, *, tb=128):
    """x: (B, STATE_SIZE) float.  Returns (B, ACTION_SIZE) float32 Q-values.

    tb is the batch tile; 128 is fine for small batches, 512-2048 is safe on v7x's
    32 MiB scoped / 64 MiB physical VMEM for large replay batches.
    """
    w1, b1, w2, b2 = params
    B = x.shape[0]
    n_tiles = pl.cdiv(B, tb)
    b_pad = n_tiles * tb

    x_bf16 = x.astype(jnp.bfloat16)
    if b_pad != B:
        x_bf16 = jnp.pad(x_bf16, ((0, b_pad - B), (0, 0)))

    out = pl.pallas_call(
        dqn_mlp_kernel,
        out_shape=jax.ShapeDtypeStruct((b_pad, A_PAD), jnp.float32),
        grid=(n_tiles,),
        in_specs=[
            pl.BlockSpec((tb, STATE_SIZE), lambda i: (i, 0)),   # x: batch-tiled
            pl.BlockSpec((STATE_SIZE, H_PAD), lambda i: (0, 0)),  # w1: resident
            pl.BlockSpec((1, H_PAD), lambda i: (0, 0)),           # b1: resident
            pl.BlockSpec((H_PAD, A_PAD), lambda i: (0, 0)),        # w2: resident
            pl.BlockSpec((1, A_PAD), lambda i: (0, 0)),            # b2: resident
        ],
        out_specs=pl.BlockSpec((tb, A_PAD), lambda i: (i, 0)),
        compiler_params=pltpu.CompilerParams(
            dimension_semantics=("parallel",)),
    )(x_bf16, w1, b1, w2, b2)
    return out[:B, :ACTION_SIZE]


def init_params(key):
    """PyTorch-Linear-style init (uniform +/- 1/sqrt(fan_in)), padded + cast for the kernel.

    Returns (w1, b1, w2, b2) with:
      w1: (STATE_SIZE, H_PAD) bf16, cols >= 100 zero
      b1: (1, H_PAD)          f32,  cols >= 100 zero
      w2: (H_PAD, A_PAD)      bf16, rows >= 100 and cols >= 16 zero
      b2: (1, A_PAD)          f32,  cols >= 16 zero
    """
    k1, k2, k3, k4 = jax.random.split(key, 4)
    bound1 = 1.0 / jnp.sqrt(STATE_SIZE)
    bound2 = 1.0 / jnp.sqrt(N_HIDDEN_LAYER_NODES)

    w1 = jax.random.uniform(k1, (STATE_SIZE, N_HIDDEN_LAYER_NODES),
                            minval=-bound1, maxval=bound1, dtype=jnp.float32)
    b1 = jax.random.uniform(k2, (1, N_HIDDEN_LAYER_NODES),
                            minval=-bound1, maxval=bound1, dtype=jnp.float32)
    w2 = jax.random.uniform(k3, (N_HIDDEN_LAYER_NODES, ACTION_SIZE),
                            minval=-bound2, maxval=bound2, dtype=jnp.float32)
    b2 = jax.random.uniform(k4, (1, ACTION_SIZE),
                            minval=-bound2, maxval=bound2, dtype=jnp.float32)

    w1_p = jnp.pad(w1, ((0, 0), (0, H_PAD - N_HIDDEN_LAYER_NODES))).astype(jnp.bfloat16)
    b1_p = jnp.pad(b1, ((0, 0), (0, H_PAD - N_HIDDEN_LAYER_NODES)))
    w2_p = jnp.pad(w2, ((0, H_PAD - N_HIDDEN_LAYER_NODES),
                        (0, A_PAD - ACTION_SIZE))).astype(jnp.bfloat16)
    b2_p = jnp.pad(b2, ((0, 0), (0, A_PAD - ACTION_SIZE)))
    return w1_p, b1_p, w2_p, b2_p


if __name__ == "__main__":
    key = jax.random.PRNGKey(0)
    kx, kp = jax.random.split(key)
    B = 8
    x = jax.random.normal(kx, (B, STATE_SIZE), dtype=jnp.float32)
    params = init_params(kp)
    w1, b1, w2, b2 = params

    out = dqn_forward(x, params)
    out = jax.block_until_ready(out)
    assert out.shape == (B, ACTION_SIZE)

    # Reference (plain JAX) using the same bf16-quantized weights/activations.
    x_q = x.astype(jnp.bfloat16).astype(jnp.float32)
    w1_u = w1[:, :N_HIDDEN_LAYER_NODES].astype(jnp.float32)
    b1_u = b1[:, :N_HIDDEN_LAYER_NODES]
    w2_u = w2[:N_HIDDEN_LAYER_NODES, :ACTION_SIZE].astype(jnp.float32)
    b2_u = b2[:, :ACTION_SIZE]
    h_ref = x_q @ w1_u + b1_u
    h_ref = jnp.maximum(h_ref, LEAKY_SLOPE * h_ref)
    h_ref = h_ref.astype(jnp.bfloat16).astype(jnp.float32)
    ref = h_ref @ w2_u + b2_u

    assert jnp.allclose(out, ref, atol=1e-2, rtol=1e-2), (
        float(jnp.max(jnp.abs(out - ref))))

    # TODO(synk): torch.optim.Adam / training step is not part of the forward pass and is
    # not translated here.
    print("KERNEL_OK")
</pallas_src>

<mosaic_0001>
module attributes {stable_mosaic.version = 11 : i64} {
  func.func @dqn_mlp_kernel(%arg0: i32, %arg1: memref<128x64xbf16, #tpu.memory_space<vmem>>, %arg2: memref<64x128xbf16, #tpu.memory_space<vmem>>, %arg3: memref<1x128xf32, #tpu.memory_space<vmem>>, %arg4: memref<128x128xbf16, #tpu.memory_space<vmem>>, %arg5: memref<1x128xf32, #tpu.memory_space<vmem>>, %arg6: memref<128x128xf32, #tpu.memory_space<vmem>>) attributes {dimension_semantics = [#tpu.dimension_semantics<parallel>], iteration_bounds = array<i64: 1>, scalar_prefetch = 0 : i64, scratch_operands = 0 : i64, tpu.core_type = #tpu.core_type<tc>, window_params = [{transform_indices = @transform_0, window_bounds = array<i64: 128, 64>}, {pipeline_mode = #tpu.pipeline_mode<synchronous>, transform_indices = @transform_1, window_bounds = array<i64: 64, 128>}, {pipeline_mode = #tpu.pipeline_mode<synchronous>, transform_indices = @transform_2, window_bounds = array<i64: 1, 128>}, {pipeline_mode = #tpu.pipeline_mode<synchronous>, transform_indices = @transform_3, window_bounds = array<i64: 128, 128>}, {pipeline_mode = #tpu.pipeline_mode<synchronous>, transform_indices = @transform_4, window_bounds = array<i64: 1, 128>}, {transform_indices = @transform_5, window_bounds = array<i64: 128, 128>}]} {
    %c0 = arith.constant 0 : index
    %c0_0 = arith.constant 0 : index
    %0 = vector.load %arg1[%c0, %c0_0] : memref<128x64xbf16, #tpu.memory_space<vmem>>, vector<128x64xbf16>
    %c0_1 = arith.constant 0 : index
    %c0_2 = arith.constant 0 : index
    %1 = vector.load %arg2[%c0_1, %c0_2] : memref<64x128xbf16, #tpu.memory_space<vmem>>, vector<64x128xbf16>
    %cst = arith.constant dense<0.000000e+00> : vector<128x128xf32>
    %2 = tpu.matmul %0, %1, %cst {dimension_numbers = #tpu.dot_dimension_numbers<[1], [0], [0], [1], [0, 0, 1, 1], [], []>} : vector<128x64xbf16>, vector<64x128xbf16>, vector<128x128xf32> -> vector<128x128xf32>
    %c0_3 = arith.constant 0 : index
    %c0_4 = arith.constant 0 : index
    %3 = vector.load %arg3[%c0_3, %c0_4] : memref<1x128xf32, #tpu.memory_space<vmem>>, vector<1x128xf32>
    %4 = vector.broadcast %3 : vector<1x128xf32> to vector<128x128xf32>
    %5 = arith.addf %2, %4 : vector<128x128xf32>
    %cst_5 = arith.constant 0.00999999977 : f32
    %6 = vector.broadcast %cst_5 : f32 to vector<128x128xf32>
    %7 = arith.mulf %6, %5 : vector<128x128xf32>
    %8 = arith.maximumf %5, %7 : vector<128x128xf32>
    %9 = arith.truncf %8 : vector<128x128xf32> to vector<128x128xbf16>
    %c0_6 = arith.constant 0 : index
    %c0_7 = arith.constant 0 : index
    %10 = vector.load %arg4[%c0_6, %c0_7] : memref<128x128xbf16, #tpu.memory_space<vmem>>, vector<128x128xbf16>
    %cst_8 = arith.constant dense<0.000000e+00> : vector<128x128xf32>
    %11 = tpu.matmul %9, %10, %cst_8 {dimension_numbers = #tpu.dot_dimension_numbers<[1], [0], [0], [1], [0, 0, 1, 1], [], []>} : vector<128x128xbf16>, vector<128x128xbf16>, vector<128x128xf32> -> vector<128x128xf32>
    %c0_9 = arith.constant 0 : index
    %c0_10 = arith.constant 0 : index
    %12 = vector.load %arg5[%c0_9, %c0_10] : memref<1x128xf32, #tpu.memory_space<vmem>>, vector<1x128xf32>
    %13 = vector.broadcast %12 : vector<1x128xf32> to vector<128x128xf32>
    %14 = arith.addf %11, %13 : vector<128x128xf32>
    %c0_11 = arith.constant 0 : index
    %c0_12 = arith.constant 0 : index
    %15 = vector.load %arg6[%c0_11, %c0_12] : memref<128x128xf32, #tpu.memory_space<vmem>>, vector<128x128xf32>
    tpu.vector_store %arg6[%c0_11, %c0_12], %14 {strides = array<i32>} : memref<128x128xf32, #tpu.memory_space<vmem>>, vector<128x128xf32>,
    return
  }
  func.func @transform_0(%arg0: i32) -> (i32, i32) {
    %c0_i32 = arith.constant 0 : i32
    %c0_i32_0 = arith.constant 0 : i32
    return %arg0, %c0_i32 : i32, i32
  }
  func.func @transform_1(%arg0: i32) -> (i32, i32) {
    %c0_i32 = arith.constant 0 : i32
    %c0_i32_0 = arith.constant 0 : i32
    %c0_i32_1 = arith.constant 0 : i32
    return %c0_i32, %c0_i32_0 : i32, i32
  }
  func.func @transform_2(%arg0: i32) -> (i32, i32) {
    %c0_i32 = arith.constant 0 : i32
    %c0_i32_0 = arith.constant 0 : i32
    %c0_i32_1 = arith.constant 0 : i32
    return %c0_i32, %c0_i32_0 : i32, i32
  }
  func.func @transform_3(%arg0: i32) -> (i32, i32) {
    %c0_i32 = arith.constant 0 : i32
    %c0_i32_0 = arith.constant 0 : i32
    %c0_i32_1 = arith.constant 0 : i32
    return %c0_i32, %c0_i32_0 : i32, i32
  }
  func.func @transform_4(%arg0: i32) -> (i32, i32) {
    %c0_i32 = arith.constant 0 : i32
    %c0_i32_0 = arith.constant 0 : i32
    %c0_i32_1 = arith.constant 0 : i32
    return %c0_i32, %c0_i32_0 : i32, i32
  }
  func.func @transform_5(%arg0: i32) -> (i32, i32) {
    %c0_i32 = arith.constant 0 : i32
    %c0_i32_0 = arith.constant 0 : i32
    return %arg0, %c0_i32 : i32, i32
  }
}

</mosaic_0001>

<llo_original>
// kernel: tpu_custom_call.1
$region0: #{tpu_custom_call.1}
  #allocation0 [shape = 'u32[]', space=smem, size = 0x4, offset = 0x4, fixed_abs, tag = 'smem constant byte address 0x4 - core index']
  #allocation1 [shape = 'u32[144,128]{1,0:T(1,128)}', space=vmem, size = 0x12000, scoped, tag = 'internal scratch']
  %s0 = inlined_call_operand.vmem [shape: bf16[128,64], index: 0, kind: input, shape index: {}]
  %s1 = inlined_call_operand.vmem [shape: bf16[64,128], index: 1, kind: input, shape index: {}]
  %s2 = inlined_call_operand.vmem [shape: f32[1,128], index: 2, kind: input, shape index: {}]
  %s3 = inlined_call_operand.vmem [shape: bf16[128,128], index: 3, kind: input, shape index: {}]
  %s4 = inlined_call_operand.vmem [shape: f32[1,128], index: 4, kind: input, shape index: {}]
  %s5 = inlined_call_operand.hbm [shape: f32[128,128], index: 5, kind: output, shape index: {}]
  %s6 = sld [smem:[#allocation0]]
  $region30: #{tpu_custom_call.1} parent=0
    _
  %s8 = ssub.s32 1, %s6
  %s9 = scalar_select 0, %s8, %s6
  $region1: #{tpu_custom_call.1} parent=0
    #allocation2 [shape = 'u8[65536]{0}', space=vmem, size = 0x10000, scoped, tag = 'output window, operand 0, single buffered']
    #allocation3 [shape = 's32[1]{0}', space=sflag, size = 0x4, scoped, tag = 'scoped memory for tpu_custom_call.1']
    %10 = vsyncpa [#allocation3], 0
    // Predicated region
    $region2: #{tpu_custom_call.1} parent=1 // pred_check
      _
    $region3: #{tpu_custom_call.1} parent=1 // pred_check_branch
      %12 = sbr.rel (0) target = $region5
    $region4: #{tpu_custom_call.1} parent=1 // pred_region
      _
    $region5: #{tpu_custom_call.1} parent=1 // pred_fallthru
      _
    // Predicated region
    $region6: #{tpu_custom_call.1} parent=1 // pred_check
      _
    $region7: #{tpu_custom_call.1} parent=1 // pred_check_branch
      %14 = sbr.rel (0) target = $region9
    $region8: #{tpu_custom_call.1} parent=1 // pred_region
      _
    $region9: #{tpu_custom_call.1} parent=1 // pred_fallthru
      _
    // Predicated region
    $region10: #{tpu_custom_call.1} parent=1 // pred_check
      _
    $region11: #{tpu_custom_call.1} parent=1 // pred_check_branch
      %16 = sbr.rel (0) target = $region13
    $region12: #{tpu_custom_call.1} parent=1 // pred_region
      _
    $region13: #{tpu_custom_call.1} parent=1 // pred_fallthru
      _
    // Predicated region
    $region14: #{tpu_custom_call.1} parent=1 // pred_check
      _
    $region15: #{tpu_custom_call.1} parent=1 // pred_check_branch
      %18 = sbr.rel (0) target = $region17
    $region16: #{tpu_custom_call.1} parent=1 // pred_region
      _
    $region17: #{tpu_custom_call.1} parent=1 // pred_fallthru
      _
    // Predicated region
    $region18: #{tpu_custom_call.1} parent=1 // pred_check
      _
    $region19: #{tpu_custom_call.1} parent=1 // pred_check_branch
      %20 = sbr.rel (0) target = $region21
    $region20: #{tpu_custom_call.1} parent=1 // pred_region
      _
    $region21: #{tpu_custom_call.1} parent=1 // pred_fallthru
      _
    %v22 = vld [vmem:[%s0] sm:$0xf]
    %v23 = vld [vmem:[%s0 + $0x4] sm:$0xf]
    %v24 = vld [vmem:[%s0 + $0x8] sm:$0xf]
    %v25 = vld [vmem:[%s0 + $0xc] sm:$0xf]
    %v26 = vld [vmem:[%s0 + $0x10] sm:$0xf]
    %v27 = vld [vmem:[%s0 + $0x14] sm:$0xf]
    %v28 = vld [vmem:[%s0 + $0x18] sm:$0xf]
    %v29 = vld [vmem:[%s0 + $0x1c] sm:$0xf]
    %v30 = vld [vmem:[%s0 + $0x20] sm:$0xf]
    %v31 = vld [vmem:[%s0 + $0x24] sm:$0xf]
    %v32 = vld [vmem:[%s0 + $0x28] sm:$0xf]
    %v33 = vld [vmem:[%s0 + $0x2c] sm:$0xf]
    %v34 = vld [vmem:[%s0 + $0x30] sm:$0xf]
    %v35 = vld [vmem:[%s0 + $0x34] sm:$0xf]
    %v36 = vld [vmem:[%s0 + $0x38] sm:$0xf]
    %v37 = vld [vmem:[%s0 + $0x3c] sm:$0xf]
    %v38 = vld [vmem:[%s1] sm:$0xf]
    %v39 = vld [vmem:[%s1 + $0x4] sm:$0xf]
    %v40 = vld [vmem:[%s1 + $0x8] sm:$0xf]
    %v41 = vld [vmem:[%s1 + $0xc] sm:$0xf]
    %v42 = vld [vmem:[%s1 + $0x10] sm:$0xf]
    %v43 = vld [vmem:[%s1 + $0x14] sm:$0xf]
    %v44 = vld [vmem:[%s1 + $0x18] sm:$0xf]
    %v45 = vld [vmem:[%s1 + $0x1c] sm:$0xf]
    %v46 = vld [vmem:[%s2] sm:$0x1]
    %v48 = vlaneseq
    %v49 = vshrl.u32 %v48, 7
    %v50 = vsub.s32 0, %v49
    %v51 = vrot.slane %v46, %v50
    %v69 = vunpack.c.l.b16 %v22
    %v70 = vunpack.c.l.b16 %v23
    %v71 = vunpack.c.l.b16 %v24
    %v72 = vunpack.c.l.b16 %v25
    %v73 = vunpack.c.l.b16 %v26
    %v74 = vunpack.c.l.b16 %v27
    %v75 = vunpack.c.l.b16 %v28
    %v76 = vunpack.c.l.b16 %v29
    %v77 = vunpack.c.l.b16 %v30
    %v78 = vunpack.c.l.b16 %v31
    %v79 = vunpack.c.l.b16 %v32
    %v80 = vunpack.c.l.b16 %v33
    %v81 = vunpack.c.l.b16 %v34
    %v82 = vunpack.c.l.b16 %v35
    %v83 = vunpack.c.l.b16 %v36
    %v84 = vunpack.c.l.b16 %v37
    %v85 = vpack.c.b16 %v70, %v69
    %v86 = vpack.c.b16 %v72, %v71
    %v87 = vpack.c.b16 %v74, %v73
    %v88 = vpack.c.b16 %v76, %v75
    %v89 = vpack.c.b16 %v78, %v77
    %v90 = vpack.c.b16 %v80, %v79
    %v91 = vpack.c.b16 %v82, %v81
    %v92 = vpack.c.b16 %v84, %v83
    %v101 = vunpack.c.l.b16 %v38
    %v102 = vunpack.c.l.b16 %v39
    %v103 = vunpack.c.l.b16 %v40
    %v104 = vunpack.c.l.b16 %v41
    %v105 = vunpack.c.l.b16 %v42
    %v106 = vunpack.c.l.b16 %v43
    %v107 = vunpack.c.l.b16 %v44
    %v108 = vunpack.c.l.b16 %v45
    %v109 = vpack.c.b16 %v102, %v101
    %v110 = vpack.c.b16 %v104, %v103
    %v111 = vpack.c.b16 %v106, %v105
    %v112 = vpack.c.b16 %v108, %v107
    %vm117 = vcmask 523264
    %v119 = vsel %vm117, %v85, 0
    %v122 = vsel %vm117, %v86, 0
    %v125 = vsel %vm117, %v87, 0
    %v128 = vsel %vm117, %v88, 0
    %v131 = vsel %vm117, %v89, 0
    %v134 = vsel %vm117, %v90, 0
    %v137 = vsel %vm117, %v91, 0
    %v140 = vsel %vm117, %v92, 0
    %142 = vmatprep.subr.bf16.mxu0 0
    %143 = vmatpush1.bf16.msra.mxu0 0
    %144 = vmatprep.subr.bf16.mxu0 0
    %145 = vmatpush1.bf16.msra.mxu0 0
    %146 = vmatprep.subr.bf16.mxu0 0
    %147 = vmatpush1.bf16.msra.mxu0 0
    %148 = vmatprep.subr.bf16.mxu0 0
    %149 = vmatpush1.bf16.msra.mxu0 0
    %150 = vmatprep.subr.bf16.mxu0 0
    %151 = vmatpush1.bf16.msra.mxu0 %v112
    %152 = vmatprep.subr.bf16.mxu0 0
    %153 = vmatpush1.bf16.msra.mxu0 %v111
    %154 = vmatprep.subr.bf16.mxu0 0
    %155 = vmatpush1.bf16.msra.mxu0 %v110
    %156 = vmatprep.subr.bf16.mxu0 0
    %157 = vmatpush1.bf16.msra.mxu0 %v109
    %158 = vmatprep.subr.bf16.mxu0 0
    %159 = vmatpush2.bf16.msra.mxu0 0
    %160 = vmatprep.subr.bf16.mxu0 0
    %161 = vmatpush2.bf16.msra.mxu0 0
    %162 = vmatprep.subr.bf16.mxu0 0
    %163 = vmatpush2.bf16.msra.mxu0 0
    %164 = vmatprep.subr.bf16.mxu0 0
    %165 = vmatpush2.bf16.msra.mxu0 0
    %166 = vmatprep.subr.bf16.mxu0 0
    %167 = vmatpush2.bf16.msra.mxu0 0
    %168 = vmatprep.subr.bf16.mxu0 0
    %169 = vmatpush2.bf16.msra.mxu0 0
    %170 = vmatprep.subr.bf16.mxu0 0
    %171 = vmatpush2.bf16.msra.mxu0 0
    %172 = vmatprep.subr.bf16.mxu0 0
    %173 = vmatpush2.bf16.msra.mxu0 0
    %174 = vmatprep.mubr.bf16.mxu0 0
    %175 = vmatmul.mubr.bf16.gmra.mxu0 %v119
    %v176 = vpop.f32.mrf.mxu0
    %v177 = vadd.f32 %v51, %v176
    %v178 = vpop.f32.mrf.mxu0
    %v179 = vpop.f32.mrf.mxu0
    %v180 = vadd.f32 %v51, %v179
    %v181 = vpop.f32.mrf.mxu0
    %182 = vmatprep.mubr.bf16.mxu0 0
    %183 = vmatmul.mubr.bf16.gmra.mxu0 %v122
    %v184 = vpop.f32.mrf.mxu0
    %v185 = vadd.f32 %v51, %v184
    %v186 = vpop.f32.mrf.mxu0
    %v187 = vpop.f32.mrf.mxu0
    %v188 = vadd.f32 %v51, %v187
    %v189 = vpop.f32.mrf.mxu0
    %190 = vmatprep.mubr.bf16.mxu0 0
    %191 = vmatmul.mubr.bf16.gmra.mxu0 %v125
    %v192 = vpop.f32.mrf.mxu0
    %v193 = vadd.f32 %v51, %v192
    %v194 = vpop.f32.mrf.mxu0
    %v195 = vpop.f32.mrf.mxu0
    %v196 = vadd.f32 %v51, %v195
    %v197 = vpop.f32.mrf.mxu0
    %198 = vmatprep.mubr.bf16.mxu0 0
    %199 = vmatmul.mubr.bf16.gmra.mxu0 %v128
    %v200 = vpop.f32.mrf.mxu0
    %v201 = vadd.f32 %v51, %v200
    %v202 = vpop.f32.mrf.mxu0
    %v203 = vpop.f32.mrf.mxu0
    %v204 = vadd.f32 %v51, %v203
    %v205 = vpop.f32.mrf.mxu0
    %206 = vmatprep.mubr.bf16.mxu0 0
    %207 = vmatmul.mubr.bf16.gmra.mxu0 %v131
    %v208 = vpop.f32.mrf.mxu0
    %v209 = vadd.f32 %v51, %v208
    %v210 = vpop.f32.mrf.mxu0
    %v211 = vpop.f32.mrf.mxu0
    %v212 = vadd.f32 %v51, %v211
    %v213 = vpop.f32.mrf.mxu0
    %214 = vmatprep.mubr.bf16.mxu0 0
    %215 = vmatmul.mubr.bf16.gmra.mxu0 %v134
    %v216 = vpop.f32.mrf.mxu0
    %v217 = vadd.f32 %v51, %v216
    %v218 = vpop.f32.mrf.mxu0
    %v219 = vpop.f32.mrf.mxu0
    %v220 = vadd.f32 %v51, %v219
    %v221 = vpop.f32.mrf.mxu0
    %222 = vmatprep.mubr.bf16.mxu0 0
    %223 = vmatmul.mubr.bf16.gmra.mxu0 %v137
    %v224 = vpop.f32.mrf.mxu0
    %v225 = vadd.f32 %v51, %v224
    %v226 = vpop.f32.mrf.mxu0
    %v227 = vpop.f32.mrf.mxu0
    %v228 = vadd.f32 %v51, %v227
    %v229 = vpop.f32.mrf.mxu0
    %230 = vmatprep.mubr.bf16.mxu0 0
    %231 = vmatmul.mubr.bf16.gmra.mxu0 %v140
    %v232 = vpop.f32.mrf.mxu0
    %v233 = vadd.f32 %v51, %v232
    %v234 = vpop.f32.mrf.mxu0
    %v235 = vpop.f32.mrf.mxu0
    %v236 = vadd.f32 %v51, %v235
    %v237 = vpop.f32.mrf.mxu0
    %238 = vdwg.mxu0
    %v239 = vmul.f32 %v177, 0.01
    %v240 = vmul.f32 %v180, 0.01
    %v241 = vmul.f32 %v185, 0.01
    %v242 = vmul.f32 %v188, 0.01
    %v243 = vmul.f32 %v193, 0.01
    %v244 = vmul.f32 %v196, 0.01
    %v245 = vmul.f32 %v201, 0.01
    %v246 = vmul.f32 %v204, 0.01
    %v247 = vmul.f32 %v209, 0.01
    %v248 = vmul.f32 %v212, 0.01
    %v249 = vmul.f32 %v217, 0.01
    %v250 = vmul.f32 %v220, 0.01
    %v251 = vmul.f32 %v225, 0.01
    %v252 = vmul.f32 %v228, 0.01
    %v253 = vmul.f32 %v233, 0.01
    %v254 = vmul.f32 %v236, 0.01
    %v255 = vmax.f32 %v177, %v239
    %v256 = vmax.f32 %v180, %v240
    %v257 = vmax.f32 %v185, %v241
    %v258 = vmax.f32 %v188, %v242
    %v259 = vmax.f32 %v193, %v243
    %v260 = vmax.f32 %v196, %v244
    %v261 = vmax.f32 %v201, %v245
    %v262 = vmax.f32 %v204, %v246
    %v263 = vmax.f32 %v209, %v247
    %v264 = vmax.f32 %v212, %v248
    %v265 = vmax.f32 %v217, %v249
    %v266 = vmax.f32 %v220, %v250
    %v267 = vmax.f32 %v225, %v251
    %v268 = vmax.f32 %v228, %v252
    %v269 = vmax.f32 %v233, %v253
    %v270 = vmax.f32 %v236, %v254
    %v271 = vpack.c.bf16 %v256, %v255
    %v272 = vpack.c.bf16 %v258, %v257
    %v273 = vpack.c.bf16 %v260, %v259
    %v274 = vpack.c.bf16 %v262, %v261
    %v275 = vpack.c.bf16 %v264, %v263
    %v276 = vpack.c.bf16 %v266, %v265
    %v277 = vpack.c.bf16 %v268, %v267
    %v278 = vpack.c.bf16 %v270, %v269
    %v279 = vld [vmem:[%s3] sm:$0xf]
    %v280 = vld [vmem:[%s3 + $0x4] sm:$0xf]
    %v281 = vld [vmem:[%s3 + $0x8] sm:$0xf]
    %v282 = vld [vmem:[%s3 + $0xc] sm:$0xf]
    %v283 = vld [vmem:[%s3 + $0x10] sm:$0xf]
    %v284 = vld [vmem:[%s3 + $0x14] sm:$0xf]
    %v285 = vld [vmem:[%s3 + $0x18] sm:$0xf]
    %v286 = vld [vmem:[%s3 + $0x1c] sm:$0xf]
    %v287 = vld [vmem:[%s3 + $0x20] sm:$0xf]
    %v288 = vld [vmem:[%s3 + $0x24] sm:$0xf]
    %v289 = vld [vmem:[%s3 + $0x28] sm:$0xf]
    %v290 = vld [vmem:[%s3 + $0x2c] sm:$0xf]
    %v291 = vld [vmem:[%s3 + $0x30] sm:$0xf]
    %v292 = vld [vmem:[%s3 + $0x34] sm:$0xf]
    %v293 = vld [vmem:[%s3 + $0x38] sm:$0xf]
    %v294 = vld [vmem:[%s3 + $0x3c] sm:$0xf]
    %v295 = vld [vmem:[%s4] sm:$0x1]
    %v297 = vlaneseq
    %v298 = vshrl.u32 %v297, 7
    %v299 = vsub.s32 0, %v298
    %v300 = vrot.slane %v295, %v299
    %v318 = vunpack.c.l.b16 %v279
    %v319 = vunpack.c.l.b16 %v280
    %v320 = vunpack.c.l.b16 %v281
    %v321 = vunpack.c.l.b16 %v282
    %v322 = vunpack.c.l.b16 %v283
    %v323 = vunpack.c.l.b16 %v284
    %v324 = vunpack.c.l.b16 %v285
    %v325 = vunpack.c.l.b16 %v286
    %v326 = vunpack.c.l.b16 %v287
    %v327 = vunpack.c.l.b16 %v288
    %v328 = vunpack.c.l.b16 %v289
    %v329 = vunpack.c.l.b16 %v290
    %v330 = vunpack.c.l.b16 %v291
    %v331 = vunpack.c.l.b16 %v292
    %v332 = vunpack.c.l.b16 %v293
    %v333 = vunpack.c.l.b16 %v294
    %v334 = vpack.c.b16 %v319, %v318
    %v335 = vpack.c.b16 %v321, %v320
    %v336 = vpack.c.b16 %v323, %v322
    %v337 = vpack.c.b16 %v325, %v324
    %v338 = vpack.c.b16 %v327, %v326
    %v339 = vpack.c.b16 %v329, %v328
    %v340 = vpack.c.b16 %v331, %v330
    %v341 = vpack.c.b16 %v333, %v332
    %350 = vmatprep.subr.bf16.mxu0 0
    %351 = vmatpush1.bf16.msra.mxu0 %v341
    %352 = vmatprep.subr.bf16.mxu0 0
    %353 = vmatpush1.bf16.msra.mxu0 %v340
    %354 = vmatprep.subr.bf16.mxu0 0
    %355 = vmatpush1.bf16.msra.mxu0 %v339
    %356 = vmatprep.subr.bf16.mxu0 0
    %357 = vmatpush1.bf16.msra.mxu0 %v338
    %358 = vmatprep.subr.bf16.mxu0 0
    %359 = vmatpush1.bf16.msra.mxu0 %v337
    %360 = vmatprep.subr.bf16.mxu0 0
    %361 = vmatpush1.bf16.msra.mxu0 %v336
    %362 = vmatprep.subr.bf16.mxu0 0
    %363 = vmatpush1.bf16.msra.mxu0 %v335
    %364 = vmatprep.subr.bf16.mxu0 0
    %365 = vmatpush1.bf16.msra.mxu0 %v334
    %366 = vmatprep.subr.bf16.mxu0 0
    %367 = vmatpush2.bf16.msra.mxu0 0
    %368 = vmatprep.subr.bf16.mxu0 0
    %369 = vmatpush2.bf16.msra.mxu0 0
    %370 = vmatprep.subr.bf16.mxu0 0
    %371 = vmatpush2.bf16.msra.mxu0 0
    %372 = vmatprep.subr.bf16.mxu0 0
    %373 = vmatpush2.bf16.msra.mxu0 0
    %374 = vmatprep.subr.bf16.mxu0 0
    %375 = vmatpush2.bf16.msra.mxu0 0
    %376 = vmatprep.subr.bf16.mxu0 0
    %377 = vmatpush2.bf16.msra.mxu0 0
    %378 = vmatprep.subr.bf16.mxu0 0
    %379 = vmatpush2.bf16.msra.mxu0 0
    %380 = vmatprep.subr.bf16.mxu0 0
    %381 = vmatpush2.bf16.msra.mxu0 0
    %382 = vmatprep.mubr.bf16.mxu0 0
    %383 = vmatmul.mubr.bf16.gmra.mxu0 %v271
    %v384 = vpop.f32.mrf.mxu0
    %v385 = vadd.f32 %v300, %v384
    %v386 = vpop.f32.mrf.mxu0
    %v387 = vpop.f32.mrf.mxu0
    %v388 = vadd.f32 %v300, %v387
    %v389 = vpop.f32.mrf.mxu0
    %390 = vmatprep.mubr.bf16.mxu0 0
    %391 = vmatmul.mubr.bf16.gmra.mxu0 %v272
    %v392 = vpop.f32.mrf.mxu0
    %v393 = vadd.f32 %v300, %v392
    %v394 = vpop.f32.mrf.mxu0
    %v395 = vpop.f32.mrf.mxu0
    %v396 = vadd.f32 %v300, %v395
    %v397 = vpop.f32.mrf.mxu0
    %398 = vmatprep.mubr.bf16.mxu0 0
    %399 = vmatmul.mubr.bf16.gmra.mxu0 %v273
    %v400 = vpop.f32.mrf.mxu0
    %v401 = vadd.f32 %v300, %v400
    %v402 = vpop.f32.mrf.mxu0
    %v403 = vpop.f32.mrf.mxu0
    %v404 = vadd.f32 %v300, %v403
    %v405 = vpop.f32.mrf.mxu0
    %406 = vmatprep.mubr.bf16.mxu0 0
    %407 = vmatmul.mubr.bf16.gmra.mxu0 %v274
    %v408 = vpop.f32.mrf.mxu0
    %v409 = vadd.f32 %v300, %v408
    %v410 = vpop.f32.mrf.mxu0
    %v411 = vpop.f32.mrf.mxu0
    %v412 = vadd.f32 %v300, %v411
    %v413 = vpop.f32.mrf.mxu0
    %414 = vmatprep.mubr.bf16.mxu0 0
    %415 = vmatmul.mubr.bf16.gmra.mxu0 %v275
    %v416 = vpop.f32.mrf.mxu0
    %v417 = vadd.f32 %v300, %v416
    %v418 = vpop.f32.mrf.mxu0
    %v419 = vpop.f32.mrf.mxu0
    %v420 = vadd.f32 %v300, %v419
    %v421 = vpop.f32.mrf.mxu0
    %422 = vmatprep.mubr.bf16.mxu0 0
    %423 = vmatmul.mubr.bf16.gmra.mxu0 %v276
    %v424 = vpop.f32.mrf.mxu0
    %v425 = vadd.f32 %v300, %v424
    %v426 = vpop.f32.mrf.mxu0
    %v427 = vpop.f32.mrf.mxu0
    %v428 = vadd.f32 %v300, %v427
    %v429 = vpop.f32.mrf.mxu0
    %430 = vmatprep.mubr.bf16.mxu0 0
    %431 = vmatmul.mubr.bf16.gmra.mxu0 %v277
    %v432 = vpop.f32.mrf.mxu0
    %v433 = vadd.f32 %v300, %v432
    %v434 = vpop.f32.mrf.mxu0
    %v435 = vpop.f32.mrf.mxu0
    %v436 = vadd.f32 %v300, %v435
    %v437 = vpop.f32.mrf.mxu0
    %438 = vmatprep.mubr.bf16.mxu0 0
    %439 = vmatmul.mubr.bf16.gmra.mxu0 %v278
    %v440 = vpop.f32.mrf.mxu0
    %v441 = vadd.f32 %v300, %v440
    %v442 = vpop.f32.mrf.mxu0
    %v443 = vpop.f32.mrf.mxu0
    %v444 = vadd.f32 %v300, %v443
    %v445 = vpop.f32.mrf.mxu0
    %446 = vdwg.mxu0
    %447 = vst [vmem:[#allocation2] sm:$0xff] %v385
    %448 = vst [vmem:[#allocation2 + $0x8] sm:$0xff] %v388
    %449 = vst [vmem:[#allocation2 + $0x10] sm:$0xff] %v393
    %450 = vst [vmem:[#allocation2 + $0x18] sm:$0xff] %v396
    %451 = vst [vmem:[#allocation2 + $0x20] sm:$0xff] %v401
    %452 = vst [vmem:[#allocation2 + $0x28] sm:$0xff] %v404
    %453 = vst [vmem:[#allocation2 + $0x30] sm:$0xff] %v409
    %454 = vst [vmem:[#allocation2 + $0x38] sm:$0xff] %v412
    %455 = vst [vmem:[#allocation2 + $0x40] sm:$0xff] %v417
    %456 = vst [vmem:[#allocation2 + $0x48] sm:$0xff] %v420
    %457 = vst [vmem:[#allocation2 + $0x50] sm:$0xff] %v425
    %458 = vst [vmem:[#allocation2 + $0x58] sm:$0xff] %v428
    %459 = vst [vmem:[#allocation2 + $0x60] sm:$0xff] %v433
    %460 = vst [vmem:[#allocation2 + $0x68] sm:$0xff] %v436
    %461 = vst [vmem:[#allocation2 + $0x70] sm:$0xff] %v441
    %462 = vst [vmem:[#allocation2 + $0x78] sm:$0xff] %v444
    // Predicated region
    $region22: #{tpu_custom_call.1} parent=1 // pred_check
      _
    $region23: #{tpu_custom_call.1} parent=1 // pred_check_branch
      %464 = sbr.rel (0) target = $region25
    $region24: #{tpu_custom_call.1} parent=1 // pred_region
      %s466 = ssub.s32 2048, 2048
      %467 = vsyncadd [#allocation3], %s466
      %s468 = sshll.u32 [#allocation2], 4
      %s469 = int_to_ptr.vmem [resolvable:$true] %s468
      %474 = dma.vmem_to_hbm [thread:$0]  %s469, 2048, %s5, [#allocation3], 128, 128, 8
    $region25: #{tpu_custom_call.1} parent=1 // pred_fallthru
      _
    // Predicated region
    $region26: #{tpu_custom_call.1} parent=1 // pred_check
      _
    $region27: #{tpu_custom_call.1} parent=1 // pred_check_branch
      %476 = sbr.rel (0) target = $region29
    $region28: #{tpu_custom_call.1} parent=1 // pred_region
      %477 = dma.done [#allocation3], 2048
    $region29: #{tpu_custom_call.1} parent=1 // pred_fallthru
      _
    %478 = vsyncpa [#allocation3], 1

</llo_original>
